<compile_context>
chip_gen: v6e
topology: v6e:2x2x1
jax: 0.10.0
libtpu: 0.0.40
codegen_flags: <defaults>
</compile_context>

<pallas_src>
import functools

import jax
import jax.numpy as jnp
from jax import lax
from jax.experimental import pallas as pl
from jax.experimental.pallas import tpu as pltpu


def _round_up(x, m):
    return (x + m - 1) // m * m


def _tpu_generation():
    """Best-effort TPU generation detection (0 = unknown / not a TPU)."""
    try:
        kind = jax.devices()[0].device_kind.lower()
    except Exception:
        return 0
    if "v7" in kind or "tpu7" in kind or "7x" in kind:
        return 7
    if "v6" in kind:
        return 6
    if "v5" in kind:
        return 5
    if "v4" in kind:
        return 4
    if "v3" in kind:
        return 3
    if "v2" in kind:
        return 2
    return 0


# -----------------------------------------------------------------------------
# Generic tiled matmul + bias:  out = x @ w + b   (bf16 operands, f32 accumulate)
# -----------------------------------------------------------------------------
def _matmul_bias_kernel(x_ref, w_ref, b_ref, o_ref, acc_ref):
    kk = pl.program_id(2)

    @pl.when(kk == 0)
    def _init():
        acc_ref[...] = jnp.zeros_like(acc_ref)

    acc_ref[...] += jnp.dot(x_ref[...], w_ref[...],
                            preferred_element_type=jnp.float32)

    @pl.when(kk == pl.num_programs(2) - 1)
    def _finalize():
        o_ref[...] = (acc_ref[...] + b_ref[...].astype(jnp.float32)).astype(o_ref.dtype)


def _matmul_bias(x, w, b, out_dtype, tm=512, tn=512, tk=1024):
    """x: (M, K), w: (K, N), b: (1, N).  Pads to tile multiples when tiling kicks in."""
    M, K = x.shape
    _, N = w.shape
    # Full-extent blocks when the dim is small (allowed even if not (8,128)-aligned),
    # otherwise aligned tiles + zero padding (zeros in K contribute nothing).
    tm = M if M <= tm else tm
    tn = N if N <= tn else tn
    tk = K if K <= tk else tk
    Mp, Kp, Np = _round_up(M, tm), _round_up(K, tk), _round_up(N, tn)
    if (Mp, Kp) != (M, K):
        x = jnp.pad(x, ((0, Mp - M), (0, Kp - K)))
    if (Kp, Np) != (K, N):
        w = jnp.pad(w, ((0, Kp - K), (0, Np - N)))
    if Np != N:
        b = jnp.pad(b, ((0, 0), (0, Np - N)))

    out = pl.pallas_call(
        _matmul_bias_kernel,
        out_shape=jax.ShapeDtypeStruct((Mp, Np), out_dtype),
        grid_spec=pltpu.PrefetchScalarGridSpec(
            num_scalar_prefetch=0,
            grid=(Mp // tm, Np // tn, Kp // tk),
            in_specs=[
                pl.BlockSpec((tm, tk), lambda i, j, kk: (i, kk)),
                pl.BlockSpec((tk, tn), lambda i, j, kk: (kk, j)),
                pl.BlockSpec((1, tn), lambda i, j, kk: (0, j)),
            ],
            out_specs=pl.BlockSpec((tm, tn), lambda i, j, kk: (i, j)),
            scratch_shapes=[pltpu.VMEM((tm, tn), jnp.float32)],
        ),
        compiler_params=pltpu.CompilerParams(
            dimension_semantics=("parallel", "parallel", "arbitrary"),
            vmem_limit_bytes=48 * 1024 * 1024),   # headroom under v7x's 64 MiB
    )(x, w, b)

    if (Mp, Np) != (M, N):
        out = out[:M, :N]
    return out


# -----------------------------------------------------------------------------
# Flash-style masked attention over grid = (batch, head, q_tile, kv_tile)
# -----------------------------------------------------------------------------
def _flash_kernel(*refs, scale, blk_q, blk_k, use_pad, bf16_exp):
    if use_pad:
        q_ref, k_ref, v_ref, pq_ref, pk_ref, o_ref, m_ref, l_ref, acc_ref = refs
    else:
        q_ref, k_ref, v_ref, o_ref, m_ref, l_ref, acc_ref = refs
        pq_ref = pk_ref = None

    qi = pl.program_id(2)
    ki = pl.program_id(3)

    @pl.when(ki == 0)
    def _init():
        m_ref[...] = jnp.full_like(m_ref, -jnp.inf)
        l_ref[...] = jnp.zeros_like(l_ref)
        acc_ref[...] = jnp.zeros_like(acc_ref)

    def step(apply_causal):
        # Scale folded into q: blk_q*hd multiplies instead of blk_q*blk_k.
        q = q_ref[0, 0] * scale                      # (blk_q, hd) bf16
        k = k_ref[0, 0]                              # (hd, blk_k) bf16, pre-transposed
        v = v_ref[0, 0]                              # (blk_k, hd) bf16

        # Scores in f32 (bf16 MXU operands, f32 accumulation); no in-kernel transpose.
        s = jnp.dot(q, k, preferred_element_type=jnp.float32)   # (blk_q, blk_k)

        if apply_causal:
            q_pos = qi * blk_q + lax.broadcasted_iota(jnp.int32, (blk_q, blk_k), 0)
            k_pos = ki * blk_k + lax.broadcasted_iota(jnp.int32, (blk_q, blk_k), 1)
            s = jnp.where(q_pos >= k_pos, s, jnp.float32(-1e9))
        if use_pad:
            # -1e9 fill (not -inf) matches torch.masked_fill: fully-padded query
            # rows stay finite (uniform attention) just like the reference.
            ok = (pq_ref[0] != 0) & (pk_ref[0] != 0)       # (blk_q,1)&(1,blk_k)
            s = jnp.where(ok, s, jnp.float32(-1e9))

        # Online softmax update; m/l/acc stay f32.
        m_prev = m_ref[...]
        m_new = jnp.maximum(m_prev, s.max(axis=-1, keepdims=True))
        alpha = jnp.exp(m_prev - m_new)              # exp(-inf)=0 on the first tile
        if bf16_exp:
            # bf16 EUP exp path (v6e/v7x): the exp, not the MXU, saturates for small hd.
            p = jnp.exp((s - m_new).astype(jnp.bfloat16))
            p_sum = jnp.sum(p.astype(jnp.float32), axis=-1, keepdims=True)
            pv = jnp.dot(p, v, preferred_element_type=jnp.float32)
        else:
            p = jnp.exp(s - m_new)
            p_sum = p.sum(axis=-1, keepdims=True)
            pv = jnp.dot(p.astype(v.dtype), v, preferred_element_type=jnp.float32)
        l_ref[...] = alpha * l_ref[...] + p_sum
        acc_ref[...] = alpha * acc_ref[...] + pv
        m_ref[...] = m_new

    # Tile classification (valid for blk_q != blk_k):
    #   fully-past  : last key pos <= first query pos  -> no causal mask needed
    #   diagonal    : overlaps the causal boundary     -> causal mask needed
    #   fully-future: skipped entirely (and its DMA is elided via the clamped index_map)
    past_end = (ki + 1) * blk_k - 1
    q_start = qi * blk_q
    in_band = ki * blk_k < (qi + 1) * blk_q

    @pl.when(past_end <= q_start)
    def _interior():
        step(apply_causal=False)

    @pl.when((past_end > q_start) & in_band)
    def _diagonal():
        step(apply_causal=True)

    # TODO(synk): nn.Dropout on the attention matrix is identity in eval mode;
    # training-mode dropout (pltpu.prng_random_bits) intentionally not applied.

    @pl.when(ki == pl.num_programs(3) - 1)
    def _finalize():
        # Exact reciprocal: only blk_q values, negligible cost, no approx error.
        o_ref[0, 0] = (acc_ref[...] * (1.0 / l_ref[...])).astype(o_ref.dtype)


def _flash_attention(q, k, v, padding_mask=None):
    """q/v: (B, H, T, hd) bf16; k: (B, H, hd, T) bf16 (pre-transposed);
    padding_mask: (B, T) bool or None.  Returns (B, H, T, hd) bf16."""
    B, H, T, hd = q.shape
    gen = _tpu_generation()
    bf16_exp = gen >= 6                      # bf16 EUP path exists on v6e/v7x only
    blk_q_cfg = 256 if gen >= 6 else 128     # 256-wide MXU on v6e/v7x; 128 on v5e/older
    blk_k_cfg = 128

    if T <= blk_k_cfg:
        blk_q = blk_k = T                    # single full-extent tile in both dims
    else:
        blk_k = blk_k_cfg
        blk_q = min(blk_q_cfg, _round_up(T, blk_k))
        blk_q = max(blk_k, (blk_q // blk_k) * blk_k)   # keep blk_q a multiple of blk_k
    Tp = _round_up(T, blk_q)

    use_pad = (padding_mask is not None) or (Tp != T)

    if Tp != T:
        q = jnp.pad(q, ((0, 0), (0, 0), (0, Tp - T), (0, 0)))
        v = jnp.pad(v, ((0, 0), (0, 0), (0, Tp - T), (0, 0)))
        k = jnp.pad(k, ((0, 0), (0, 0), (0, 0), (0, Tp - T)))

    inputs = [q, k, v]
    nq, nk = Tp // blk_q, Tp // blk_k
    scale = 1.0 / float(hd) ** 0.5

    def kv_block(qi, ki):
        # Clamp to the last kv tile overlapping q tile qi: the block index stops
        # advancing for causally-dead tiles, so Pallas elides their DMA.
        kmax = ((qi + 1) * blk_q - 1) // blk_k
        return jnp.minimum(ki, kmax)

    in_specs = [
        pl.BlockSpec((1, 1, blk_q, hd), lambda b, h, qi, ki: (b, h, qi, 0)),          # q
        pl.BlockSpec((1, 1, hd, blk_k), lambda b, h, qi, ki: (b, h, 0, kv_block(qi, ki))),  # k (hd, T)
        pl.BlockSpec((1, 1, blk_k, hd), lambda b, h, qi, ki: (b, h, kv_block(qi, ki), 0)),  # v
    ]

    if use_pad:
        if padding_mask is None:
            valid = jnp.ones((B, T), dtype=jnp.int32)
        else:
            valid = padding_mask.reshape(B, T).astype(jnp.int32)
        if Tp != T:
            valid = jnp.pad(valid, ((0, 0), (0, Tp - T)))          # padded kv rows masked out
        pad_rows = valid.reshape(B, Tp, 1)    # query-row mask, column-vector layout
        pad_cols = valid.reshape(B, 1, Tp)    # key-column mask, row-vector layout
        inputs += [pad_rows, pad_cols]
        in_specs += [
            pl.BlockSpec((1, blk_q, 1), lambda b, h, qi, ki: (b, qi, 0)),
            pl.BlockSpec((1, 1, blk_k), lambda b, h, qi, ki: (b, 0, kv_block(qi, ki))),
        ]

    kernel = functools.partial(_flash_kernel, scale=scale, blk_q=blk_q, blk_k=blk_k,
                               use_pad=use_pad, bf16_exp=bf16_exp)

    out = pl.pallas_call(
        kernel,
        out_shape=jax.ShapeDtypeStruct((B, H, Tp, hd), q.dtype),
        grid_spec=pltpu.PrefetchScalarGridSpec(
            num_scalar_prefetch=0,
            grid=(B, H, nq, nk),
            in_specs=in_specs,
            out_specs=pl.BlockSpec((1, 1, blk_q, hd), lambda b, h, qi, ki: (b, h, qi, 0)),
            scratch_shapes=[
                pltpu.VMEM((blk_q, 1), jnp.float32),    # running max
                pltpu.VMEM((blk_q, 1), jnp.float32),    # running denominator
                pltpu.VMEM((blk_q, hd), jnp.float32),   # running numerator
            ],
        ),
        compiler_params=pltpu.CompilerParams(
            dimension_semantics=("parallel", "parallel", "parallel", "arbitrary"),
            vmem_limit_bytes=48 * 1024 * 1024),
    )(*inputs)

    if Tp != T:
        out = out[:, :, :T, :]
    return out


# -----------------------------------------------------------------------------
# Public wrapper: full MaskedSelfAttention forward (eval mode)
# -----------------------------------------------------------------------------
def masked_self_attention(x, params, num_heads, padding_mask=None):
    """x: (B, T, E) f32; params = (wq, bq, wk, bk, wv, bv, wp, bp), weights (in, out)."""
    B, T, E = x.shape
    hd = E // num_heads
    wq, bq, wk, bk, wv, bv, wp, bp = params

    # Fused QKV weights/bias: (E, 3E) bf16, (1, 3E) f32.
    w_qkv = jnp.concatenate([wq, wk, wv], axis=1).astype(jnp.bfloat16)
    b_qkv = jnp.concatenate(
        [bq.reshape(1, E), bk.reshape(1, E), bv.reshape(1, E)], axis=1
    ).astype(jnp.float32)

    # 1) fused QKV projection with B*T collapsed into the sublane/M dim.
    x2d = x.reshape(B * T, E).astype(jnp.bfloat16)
    qkv = _matmul_bias(x2d, w_qkv, b_qkv, out_dtype=jnp.bfloat16)      # (B*T, 3E)

    # Head layout plumbing once in the wrapper; K is pre-transposed to (B, H, hd, T)
    # so the in-kernel score matmul needs no per-step transpose.
    qkv = qkv.reshape(B, T, 3, num_heads, hd)
    q = qkv[:, :, 0].transpose(0, 2, 1, 3)   # (B, H, T, hd)
    k = qkv[:, :, 1].transpose(0, 2, 3, 1)   # (B, H, hd, T)
    v = qkv[:, :, 2].transpose(0, 2, 1, 3)   # (B, H, T, hd)

    # 2) flash-style masked attention.
    attn = _flash_attention(q, k, v, padding_mask)                     # (B, H, T, hd)

    # 3) output projection back to (B, T, E).
    attn2d = attn.transpose(0, 2, 1, 3).reshape(B * T, E)
    out = _matmul_bias(attn2d, wp.astype(jnp.bfloat16),
                       bp.reshape(1, E).astype(jnp.float32), out_dtype=x.dtype)
    return out.reshape(B, T, E)


def _reference(x, params, num_heads, padding_mask=None):
    """Pure-JAX f32 reference mirroring the PyTorch forward (eval mode)."""
    wq, bq, wk, bk, wv, bv, wp, bp = params
    B, T, E = x.shape
    hd = E // num_heads
    q = (x @ wq + bq).reshape(B, T, num_heads, hd).transpose(0, 2, 1, 3)
    k = (x @ wk + bk).reshape(B, T, num_heads, hd).transpose(0, 2, 1, 3)
    v = (x @ wv + bv).reshape(B, T, num_heads, hd).transpose(0, 2, 1, 3)
    att = jnp.einsum('bhtd,bhsd->bhts', q, k) / (hd ** 0.5)
    tril = jnp.tril(jnp.ones((T, T), dtype=bool))
    mask = tril[None, None]
    if padding_mask is not None:
        pm = padding_mask[:, None, None, :]
        mask = mask & pm & jnp.swapaxes(pm, -1, -2)
    att = jnp.where(mask, att, -1e9)
    att = jax.nn.softmax(att, axis=-1)
    out = jnp.einsum('bhts,bhsd->bhtd', att, v)
    out = out.transpose(0, 2, 1, 3).reshape(B, T, E)
    return out @ wp + bp


if __name__ == "__main__":
    # Small config consistent with the module: embed_dim=32, num_heads=4,
    # context_len=8, batch=2.  dropout_rate irrelevant in eval mode.
    B, T, E, H = 2, 8, 32, 4

    key = jax.random.PRNGKey(0)
    keys = jax.random.split(key, 10)
    init_w = lambda kk: (0.02 * jax.random.normal(kk, (E, E))).astype(jnp.float32)
    init_b = lambda kk: (0.02 * jax.random.normal(kk, (1, E))).astype(jnp.float32)
    params = (init_w(keys[0]), init_b(keys[1]),   # Wq, bq  (already (in, out))
              init_w(keys[2]), init_b(keys[3]),   # Wk, bk
              init_w(keys[4]), init_b(keys[5]),   # Wv, bv
              init_w(keys[6]), init_b(keys[7]))   # Wproj, bproj

    x = jax.random.normal(keys[8], (B, T, E), dtype=jnp.float32)
    padding_mask = jnp.array([[1, 1, 1, 1, 1, 1, 0, 0],
                              [1, 1, 1, 1, 1, 1, 1, 1]], dtype=bool)

    out = masked_self_attention(x, params, H, padding_mask)
    out = jax.block_until_ready(out)

    ref = _reference(x, params, H, padding_mask)
    assert out.shape == (B, T, E)
    # Looser tolerance than a pure-f32 path: MXU operands (and, on v6e/v7x, the
    # softmax exp) are bf16 with f32 accumulation.
    assert jnp.allclose(out, ref, atol=2e-2, rtol=2e-2), "mismatch vs reference"

    print("KERNEL_OK")
</pallas_src>

<mosaic_0001>
module attributes {stable_mosaic.version = 11 : i64} {
  func.func @_matmul_bias_kernel(%arg0: i32, %arg1: i32, %arg2: i32, %arg3: memref<16x32xbf16, #tpu.memory_space<vmem>>, %arg4: memref<32x96xbf16, #tpu.memory_space<vmem>>, %arg5: memref<1x96xf32, #tpu.memory_space<vmem>>, %arg6: memref<16x96xbf16, #tpu.memory_space<vmem>>, %arg7: memref<16x96xf32, #tpu.memory_space<vmem>>) attributes {dimension_semantics = [#tpu.dimension_semantics<parallel>, #tpu.dimension_semantics<parallel>, #tpu.dimension_semantics<arbitrary>], iteration_bounds = array<i64: 1, 1, 1>, scalar_prefetch = 0 : i64, scratch_operands = 1 : i64, tpu.core_type = #tpu.core_type<tc>, window_params = [{transform_indices = @transform_0, window_bounds = array<i64: 16, 32>}, {transform_indices = @transform_1, window_bounds = array<i64: 32, 96>}, {transform_indices = @transform_2, window_bounds = array<i64: 1, 96>}, {transform_indices = @transform_3, window_bounds = array<i64: 16, 96>}]} {
    %c0_i32 = arith.constant 0 : i32
    %0 = arith.cmpi eq, %arg2, %c0_i32 : i32
    %1 = arith.extui %0 : i1 to i32
    %c0_i32_0 = arith.constant 0 : i32
    %2 = arith.cmpi ne, %1, %c0_i32_0 : i32
    scf.if %2 {
      %cst_10 = arith.constant 0.000000e+00 : f32
      %12 = vector.broadcast %cst_10 : f32 to vector<16x96xf32>
      %c0_11 = arith.constant 0 : index
      %c0_12 = arith.constant 0 : index
      %13 = vector.load %arg7[%c0_11, %c0_12] : memref<16x96xf32, #tpu.memory_space<vmem>>, vector<16x96xf32>
      tpu.vector_store %arg7[%c0_11, %c0_12], %12 {strides = array<i32>} : memref<16x96xf32, #tpu.memory_space<vmem>>, vector<16x96xf32>,
    } else {
    }
    %c0 = arith.constant 0 : index
    %c0_1 = arith.constant 0 : index
    %3 = vector.load %arg7[%c0, %c0_1] : memref<16x96xf32, #tpu.memory_space<vmem>>, vector<16x96xf32>
    %c0_2 = arith.constant 0 : index
    %c0_3 = arith.constant 0 : index
    %4 = vector.load %arg3[%c0_2, %c0_3] : memref<16x32xbf16, #tpu.memory_space<vmem>>, vector<16x32xbf16>
    %c0_4 = arith.constant 0 : index
    %c0_5 = arith.constant 0 : index
    %5 = vector.load %arg4[%c0_4, %c0_5] : memref<32x96xbf16, #tpu.memory_space<vmem>>, vector<32x96xbf16>
    %cst = arith.constant dense<0.000000e+00> : vector<16x96xf32>
    %6 = tpu.matmul %4, %5, %cst {dimension_numbers = #tpu.dot_dimension_numbers<[1], [0], [0], [1], [0, 0, 1, 1], [], []>} : vector<16x32xbf16>, vector<32x96xbf16>, vector<16x96xf32> -> vector<16x96xf32>
    %7 = arith.addf %3, %6 : vector<16x96xf32>
    %c0_6 = arith.constant 0 : index
    %c0_7 = arith.constant 0 : index
    %8 = vector.load %arg7[%c0_6, %c0_7] : memref<16x96xf32, #tpu.memory_space<vmem>>, vector<16x96xf32>
    tpu.vector_store %arg7[%c0_6, %c0_7], %7 {strides = array<i32>} : memref<16x96xf32, #tpu.memory_space<vmem>>, vector<16x96xf32>,
    %c0_i32_8 = arith.constant 0 : i32
    %9 = arith.cmpi eq, %arg2, %c0_i32_8 : i32
    %10 = arith.extui %9 : i1 to i32
    %c0_i32_9 = arith.constant 0 : i32
    %11 = arith.cmpi ne, %10, %c0_i32_9 : i32
    scf.if %11 {
      %c0_10 = arith.constant 0 : index
      %c0_11 = arith.constant 0 : index
      %12 = vector.load %arg7[%c0_10, %c0_11] : memref<16x96xf32, #tpu.memory_space<vmem>>, vector<16x96xf32>
      %c0_12 = arith.constant 0 : index
      %c0_13 = arith.constant 0 : index
      %13 = vector.load %arg5[%c0_12, %c0_13] : memref<1x96xf32, #tpu.memory_space<vmem>>, vector<1x96xf32>
      %14 = vector.broadcast %13 : vector<1x96xf32> to vector<16x96xf32>
      %15 = arith.addf %12, %14 : vector<16x96xf32>
      %16 = arith.truncf %15 : vector<16x96xf32> to vector<16x96xbf16>
      %c0_14 = arith.constant 0 : index
      %c0_15 = arith.constant 0 : index
      %17 = vector.load %arg6[%c0_14, %c0_15] : memref<16x96xbf16, #tpu.memory_space<vmem>>, vector<16x96xbf16>
      tpu.vector_store %arg6[%c0_14, %c0_15], %16 {strides = array<i32>} : memref<16x96xbf16, #tpu.memory_space<vmem>>, vector<16x96xbf16>,
    } else {
    }
    return
  }
  func.func @transform_0(%arg0: i32, %arg1: i32, %arg2: i32) -> (i32, i32) {
    %c0_i32 = arith.constant 0 : i32
    return %arg0, %arg2 : i32, i32
  }
  func.func @transform_1(%arg0: i32, %arg1: i32, %arg2: i32) -> (i32, i32) {
    %c0_i32 = arith.constant 0 : i32
    return %arg2, %arg1 : i32, i32
  }
  func.func @transform_2(%arg0: i32, %arg1: i32, %arg2: i32) -> (i32, i32) {
    %c0_i32 = arith.constant 0 : i32
    %c0_i32_0 = arith.constant 0 : i32
    return %c0_i32, %arg1 : i32, i32
  }
  func.func @transform_3(%arg0: i32, %arg1: i32, %arg2: i32) -> (i32, i32) {
    %c0_i32 = arith.constant 0 : i32
    return %arg0, %arg1 : i32, i32
  }
}

</mosaic_0001>

<llo_original>
// kernel: tpu_custom_call.1
$region0: #{tpu_custom_call.1}
  #allocation0 [shape = 'u32[]', space=smem, size = 0x4, offset = 0x4, fixed_abs, tag = 'smem constant byte address 0x4 - core index']
  #allocation1 [shape = 'u32[144,128]{1,0:T(1,128)}', space=vmem, size = 0x12000, scoped, tag = 'internal scratch']
  #allocation2 [shape = 'f32[16,96]{1,0:T(8,128)}', space=vmem, size = 0x2000, scoped, tag = 'scratch operand']
  %s0 = inlined_call_operand.hbm [shape: bf16[16,32], index: 0, kind: input, shape index: {}]
  %s1 = inlined_call_operand.hbm [shape: bf16[32,96], index: 1, kind: input, shape index: {}]
  %s2 = inlined_call_operand.vmem [shape: f32[1,96], index: 2, kind: input, shape index: {}]
  %s3 = inlined_call_operand.hbm [shape: bf16[16,96], index: 3, kind: output, shape index: {}]
  %s4 = sld [smem:[#allocation0]]
  $region38: #{tpu_custom_call.1} parent=0
    _
  %s6 = ssub.s32 1, %s4
  %s7 = scalar_select 0, %s6, %s4
  $region1: #{tpu_custom_call.1} parent=0
    #allocation3 [shape = 'u8[4096]{0}', space=vmem, size = 0x1000, scoped, tag = 'input window, operand 0, single buffered']
    #allocation4 [shape = 's32[1]{0}', space=sflag, size = 0x4, scoped, tag = 'scoped memory for tpu_custom_call.1']
    #allocation5 [shape = 's32[1]{0}', space=sflag, size = 0x4, scoped, tag = 'scoped memory for tpu_custom_call.1']
    #allocation6 [shape = 'u8[8192]{0}', space=vmem, size = 0x2000, scoped, tag = 'input window, operand 1, single buffered']
    #allocation7 [shape = 's32[1]{0}', space=sflag, size = 0x4, scoped, tag = 'scoped memory for tpu_custom_call.1']
    #allocation8 [shape = 'u8[4096]{0}', space=vmem, size = 0x1000, scoped, tag = 'output window, operand 0, single buffered']
    %8 = vsyncpa [#allocation4], 0
    %9 = vsyncpa [#allocation7], 0
    %10 = vsyncpa [#allocation5], 0
    // Predicated region
    $region2: #{tpu_custom_call.1} parent=1 // pred_check
      _
    $region3: #{tpu_custom_call.1} parent=1 // pred_check_branch
      %12 = sbr.rel (0) target = $region5
    $region4: #{tpu_custom_call.1} parent=1 // pred_region
      %s14 = ssub.s32 128, 128
      %15 = vsyncadd [#allocation4], %s14
      %s16 = sshll.u32 [#allocation3], 4
      %s17 = int_to_ptr.vmem [resolvable:$true] %s16
      %22 = dma.hbm_to_vmem [thread:$0]  %s0, 128, %s17, [#allocation4], 64, 64, 4
    $region5: #{tpu_custom_call.1} parent=1 // pred_fallthru
      _
    // Predicated region
    $region6: #{tpu_custom_call.1} parent=1 // pred_check
      _
    $region7: #{tpu_custom_call.1} parent=1 // pred_check_branch
      %24 = sbr.rel (0) target = $region9
    $region8: #{tpu_custom_call.1} parent=1 // pred_region
      %s26 = ssub.s32 256, 256
      %27 = vsyncadd [#allocation7], %s26
      %s28 = sshll.u32 [#allocation6], 4
      %s29 = int_to_ptr.vmem [resolvable:$true] %s28
      %34 = dma.hbm_to_vmem [thread:$0]  %s1, 256, %s29, [#allocation7], 64, 64, 4
    $region9: #{tpu_custom_call.1} parent=1 // pred_fallthru
      _
    // Predicated region
    $region10: #{tpu_custom_call.1} parent=1 // pred_check
      _
    $region11: #{tpu_custom_call.1} parent=1 // pred_check_branch
      %36 = sbr.rel (0) target = $region13
    $region12: #{tpu_custom_call.1} parent=1 // pred_region
      _
    $region13: #{tpu_custom_call.1} parent=1 // pred_fallthru
      _
    // Predicated region
    $region14: #{tpu_custom_call.1} parent=1 // pred_check
      _
    $region15: #{tpu_custom_call.1} parent=1 // pred_check_branch
      %38 = sbr.rel (0) target = $region17
    $region16: #{tpu_custom_call.1} parent=1 // pred_region
      %39 = dma.done [#allocation4], 128
    $region17: #{tpu_custom_call.1} parent=1 // pred_fallthru
      _
    // Predicated region
    $region18: #{tpu_custom_call.1} parent=1 // pred_check
      _
    $region19: #{tpu_custom_call.1} parent=1 // pred_check_branch
      %41 = sbr.rel (0) target = $region21
    $region20: #{tpu_custom_call.1} parent=1 // pred_region
      %42 = dma.done [#allocation7], 256
    $region21: #{tpu_custom_call.1} parent=1 // pred_fallthru
      _
    %p44 = scmp.eq.s32.totalorder 0, 0
    // Predicated region
    $region22: #{tpu_custom_call.1} parent=1 // pred_check
      %p45 = pneg %p44
    $region23: #{tpu_custom_call.1} parent=1 // pred_check_branch
      %47 = sbr.rel (%p45) target = $region25
    $region24: #{tpu_custom_call.1} parent=1 // pred_region
      %vm48 = vcmask 785408
      %49 = vst.msk [vmem:[#allocation2] sm:$0xff] %vm48, 0.0
      %50 = vst.msk [vmem:[#allocation2 + $0x8] sm:$0xff] %vm48, 0.0
    $region25: #{tpu_custom_call.1} parent=1 // pred_fallthru
      _
    %v51 = vld [vmem:[#allocation2] sm:$0xff]
    %v52 = vld [vmem:[#allocation2 + $0x8] sm:$0xff]
    %v53 = vld [vmem:[#allocation3] sm:$0xf]
    %v54 = vld [vmem:[#allocation3 + $0x4] sm:$0xf]
    %v55 = vld [vmem:[#allocation6] sm:$0xf]
    %v56 = vld [vmem:[#allocation6 + $0x4] sm:$0xf]
    %v57 = vld [vmem:[#allocation6 + $0x8] sm:$0xf]
    %v58 = vld [vmem:[#allocation6 + $0xc] sm:$0xf]
    %v61 = vunpack.c.l.b16 %v53
    %v62 = vunpack.c.l.b16 %v54
    %v63 = vpack.c.b16 %v62, %v61
    %v68 = vunpack.c.l.b16 %v55
    %v69 = vunpack.c.l.b16 %v56
    %v70 = vunpack.c.l.b16 %v57
    %v71 = vunpack.c.l.b16 %v58
    %v72 = vpack.c.b16 %v69, %v68
    %v73 = vpack.c.b16 %v71, %v70
    %vm76 = vcmask 261120
    %v78 = vsel %vm76, %v63, 0
    %80 = vmatprep.subr.bf16.mxu0 0
    %81 = vmatpush1.bf16.msra.mxu0 0
    %82 = vmatprep.subr.bf16.mxu0 0
    %83 = vmatpush1.bf16.msra.mxu0 0
    %84 = vmatprep.subr.bf16.mxu0 0
    %85 = vmatpush1.bf16.msra.mxu0 0
    %86 = vmatprep.subr.bf16.mxu0 0
    %87 = vmatpush1.bf16.msra.mxu0 0
    %88 = vmatprep.subr.bf16.mxu0 0
    %89 = vmatpush1.bf16.msra.mxu0 0
    %90 = vmatprep.subr.bf16.mxu0 0
    %91 = vmatpush1.bf16.msra.mxu0 0
    %92 = vmatprep.subr.bf16.mxu0 0
    %93 = vmatpush1.bf16.msra.mxu0 %v73
    %94 = vmatprep.subr.bf16.mxu0 0
    %95 = vmatpush1.bf16.msra.mxu0 %v72
    %96 = vmatprep.subr.bf16.mxu0 0
    %97 = vmatpush2.bf16.msra.mxu0 0
    %98 = vmatprep.subr.bf16.mxu0 0
    %99 = vmatpush2.bf16.msra.mxu0 0
    %100 = vmatprep.subr.bf16.mxu0 0
    %101 = vmatpush2.bf16.msra.mxu0 0
    %102 = vmatprep.subr.bf16.mxu0 0
    %103 = vmatpush2.bf16.msra.mxu0 0
    %104 = vmatprep.subr.bf16.mxu0 0
    %105 = vmatpush2.bf16.msra.mxu0 0
    %106 = vmatprep.subr.bf16.mxu0 0
    %107 = vmatpush2.bf16.msra.mxu0 0
    %108 = vmatprep.subr.bf16.mxu0 0
    %109 = vmatpush2.bf16.msra.mxu0 0
    %110 = vmatprep.subr.bf16.mxu0 0
    %111 = vmatpush2.bf16.msra.mxu0 0
    %112 = vmatprep.mubr.bf16.mxu0 0
    %113 = vmatmul.mubr.bf16.gmra.mxu0 %v78
    %v114 = vpop.f32.mrf.mxu0
    %v115 = vadd.f32 0.0, %v114
    %v116 = vpop.f32.mrf.mxu0
    %v117 = vpop.f32.mrf.mxu0
    %v118 = vadd.f32 0.0, %v117
    %v119 = vpop.f32.mrf.mxu0
    %120 = vdwg.mxu0
    %v121 = vadd.f32 %v51, %v115
    %v122 = vadd.f32 %v52, %v118
    %vm123 = vcmask 785408
    %124 = vst.msk [vmem:[#allocation2] sm:$0xff] %vm123, %v121
    %125 = vst.msk [vmem:[#allocation2 + $0x8] sm:$0xff] %vm123, %v122
    // Predicated region
    $region26: #{tpu_custom_call.1} parent=1 // pred_check
      %p126 = pneg %p44
    $region27: #{tpu_custom_call.1} parent=1 // pred_check_branch
      %128 = sbr.rel (%p126) target = $region29
    $region28: #{tpu_custom_call.1} parent=1 // pred_region
      %v129 = vld [vmem:[#allocation2] sm:$0xff]
      %v130 = vld [vmem:[#allocation2 + $0x8] sm:$0xff]
      %v131 = vld [vmem:[%s2] sm:$0x1]
      %v133 = vlaneseq
      %v134 = vshrl.u32 %v133, 7
      %v135 = vsub.s32 0, %v134
      %v136 = vrot.slane %v131, %v135
      %v138 = vadd.f32 %v129, %v136
      %v139 = vadd.f32 %v130, %v136
      %v140 = vpack.c.bf16 %v139, %v138
      %v142 = vunpack.c.l.b16 %v140
      %v143 = vunpack.c.h.b16 %v140
      %v144 = vpack.c.b16 %v142, %v142
      %v145 = vpack.c.b16 %v143, %v143
      %vm148 = vcmask 781312
      %149 = vst.msk [vmem:[#allocation8] sm:$0xf] %vm148, %v144
      %150 = vst.msk [vmem:[#allocation8 + $0x4] sm:$0xf] %vm148, %v145
    $region29: #{tpu_custom_call.1} parent=1 // pred_fallthru
      _
    // Predicated region
    $region30: #{tpu_custom_call.1} parent=1 // pred_check
      _
    $region31: #{tpu_custom_call.1} parent=1 // pred_check_branch
      %152 = sbr.rel (0) target = $region33
    $region32: #{tpu_custom_call.1} parent=1 // pred_region
      %s154 = ssub.s32 128, 128
      %155 = vsyncadd [#allocation5], %s154
      %s156 = sshll.u32 [#allocation8], 4
      %s157 = int_to_ptr.vmem [resolvable:$true] %s156
      %162 = dma.vmem_to_hbm [thread:$0]  %s157, 128, %s3, [#allocation5], 64, 64, 4
    $region33: #{tpu_custom_call.1} parent=1 // pred_fallthru
      _
    // Predicated region
    $region34: #{tpu_custom_call.1} parent=1 // pred_check
      _
    $region35: #{tpu_custom_call.1} parent=1 // pred_check_branch
      %164 = sbr.rel (0) target = $region37
    $region36: #{tpu_custom_call.1} parent=1 // pred_region
      %165 = dma.done [#allocation5], 128
    $region37: #{tpu_custom_call.1} parent=1 // pred_fallthru
      _
    %166 = vsyncpa [#allocation4], 1
    %167 = vsyncpa [#allocation7], 1
    %168 = vsyncpa [#allocation5], 1

</llo_original>
